<compile_context>
chip_gen: v7x
topology: tpu7x:2x2x1
jax: 0.10.0
libtpu: 0.0.40
codegen_flags: <defaults>
</compile_context>

<pallas_src>
import functools

import jax
import jax.numpy as jnp
from jax.experimental import pallas as pl
from jax.experimental.pallas import tpu as pltpu

LANES = 128
SUBLANES = 8
ROW_ALIGN = 32              # covers f32 (8,128), bf16 (16,128), int8 (32,128) tiling
DEFAULT_BLOCK_ROWS = 4096   # 2 MiB per f32 input block; 8 MiB total double-buffered
NUM_CORES = 2               # leading 'parallel' axis -> both TCs on v7x
VMEM_LIMIT_BYTES = 32 * 1024 * 1024


def _focal_kernel(p_ref, t_ref, out_ref, acc_ref, *, alpha, gamma, smooth):
    i = pl.program_id(1)

    @pl.when(i == 0)
    def _():
        acc_ref[...] = jnp.zeros_like(acc_ref)

    # Load in native dtype, compute in f32 (v5e VPU/EUP have no bf16 path).
    p = jnp.clip(p_ref[...].astype(jnp.float32), smooth, 1.0 - smooth)
    t = t_ref[...].astype(jnp.float32)

    is_pos = t == 1.0
    is_neg = t == 0.0

    #   t==1: q = p,     coeff = -alpha
    #   t==0: q = 1 - p, coeff = -(1 - alpha)
    #   else (including sentinel-padded t==2): coeff = 0 -> exact 0 contribution
    q = jnp.where(is_pos, p, 1.0 - p)
    coeff = jnp.where(is_pos, jnp.float32(-alpha),
                      jnp.where(is_neg, jnp.float32(-(1.0 - alpha)),
                                jnp.float32(0.0)))

    one_minus_q = 1.0 - q
    if gamma == 2.0:                       # default: avoid exp(g*log(x))
        w = one_minus_q * one_minus_q
    elif gamma == 1.0:
        w = one_minus_q
    elif gamma == 0.0:
        w = jnp.ones_like(one_minus_q)
    else:
        w = jnp.power(one_minus_q, jnp.float32(gamma))

    loss = coeff * w * jnp.log(q)          # single EUP transcendental per element

    # Per-step reduction = pure VPU adds into a vreg-shaped (8,128) accumulator;
    # the cross-lane/sublane reduce happens once per core at the final step.
    rows_in_blk = loss.shape[0]
    partial = loss.reshape(rows_in_blk // SUBLANES, SUBLANES, LANES).sum(axis=0)
    acc_ref[...] = acc_ref[...] + partial

    @pl.when(i == pl.num_programs(1) - 1)
    def _():
        out_ref[...] = jnp.sum(acc_ref[...], axis=(0, 1), keepdims=True)


def focal_loss_2d(prob, target, *, alpha=0.25, gamma=2.0, smooth=1e-6,
                  block_rows=DEFAULT_BLOCK_ROWS):
    """Pallas TPU implementation of FocalLoss2d.forward (ignore_index=None).

    The PyTorch module reduces with .mean() over all elements regardless of
    `reduction`, so we do too. Inputs are consumed in their native dtypes
    (pass int8/bf16 targets to cut HBM traffic on v5e/v6e).
    """
    assert prob.shape == target.shape
    n = prob.size

    # Row-major flatten is free for contiguous arrays; no dtype cast here.
    p_flat = jnp.ravel(prob)
    t_flat = jnp.ravel(target)
    if t_flat.dtype == jnp.bool_:
        # bool cannot hold the sentinel value 2; int8 keeps traffic narrow.
        t_flat = t_flat.astype(jnp.int8)

    # Block-size selection: big blocks for large inputs, clamped (and aligned
    # to ROW_ALIGN sublanes) for small ones so the pad stays tiny.
    rows_needed = pl.cdiv(n, LANES)
    block_rows = int(min(block_rows, pl.cdiv(rows_needed, NUM_CORES)))
    block_rows = max(ROW_ALIGN, pl.cdiv(block_rows, ROW_ALIGN) * ROW_ALIGN)

    # Pad to a whole number of (core, block) tiles with sentinel values:
    # t=2 (neither 0 nor 1) => coeff=0, p=0.5 keeps log finite, so padded
    # elements contribute exactly 0 -- no per-element mask in the kernel.
    chunk = NUM_CORES * block_rows * LANES
    n_pad = pl.cdiv(n, chunk) * chunk
    pad = n_pad - n
    if pad:
        p_flat = jnp.pad(p_flat, (0, pad), constant_values=0.5)
        t_flat = jnp.pad(t_flat, (0, pad), constant_values=2)

    rows = n_pad // LANES
    n_tiles = (rows // NUM_CORES) // block_rows

    p2 = p_flat.reshape(rows, LANES)
    t2 = t_flat.reshape(rows, LANES)

    kernel = functools.partial(
        _focal_kernel,
        alpha=float(alpha), gamma=float(gamma), smooth=float(smooth),
    )

    partials = pl.pallas_call(
        kernel,
        out_shape=jax.ShapeDtypeStruct((NUM_CORES, 1, 1), jnp.float32),
        grid_spec=pltpu.PrefetchScalarGridSpec(
            num_scalar_prefetch=0,
            grid=(NUM_CORES, n_tiles),
            in_specs=[
                pl.BlockSpec((block_rows, LANES),
                             lambda c, i: (c * n_tiles + i, 0)),
                pl.BlockSpec((block_rows, LANES),
                             lambda c, i: (c * n_tiles + i, 0)),
            ],
            out_specs=pl.BlockSpec((None, 1, 1), lambda c, i: (c, 0, 0)),
            scratch_shapes=[pltpu.VMEM((SUBLANES, LANES), jnp.float32)],
        ),
        compiler_params=pltpu.CompilerParams(
            dimension_semantics=("parallel", "arbitrary"),
            vmem_limit_bytes=VMEM_LIMIT_BYTES),
    )(p2, t2)

    # Combine per-core partials + mean in the wrapper (two adds, negligible).
    return jnp.sum(partials) / jnp.float32(n)


def focal_loss_2d_ref(prob, target, *, alpha=0.25, gamma=2.0, smooth=1e-6):
    """Pure-JAX reference mirroring the PyTorch forward exactly."""
    p = jnp.clip(prob.astype(jnp.float32), smooth, 1.0 - smooth)
    t = target.astype(jnp.float32)
    pos_mask = (t == 1.0).astype(jnp.float32)
    neg_mask = (t == 0.0).astype(jnp.float32)
    pos_loss = -alpha * (pos_mask * jnp.power(1.0 - p, gamma) * jnp.log(p))
    neg_loss = -(1.0 - alpha) * (neg_mask * jnp.power(p, gamma) * jnp.log(1.0 - p))
    return jnp.mean(pos_loss + neg_loss)


if __name__ == "__main__":
    key = jax.random.PRNGKey(0)
    k_prob, k_tgt = jax.random.split(key)

    # NCHW inputs, as a segmentation head would emit: (B, C, H, W)
    shape = (2, 4, 16, 16)
    prob = jax.random.uniform(k_prob, shape, dtype=jnp.float32)
    target = jax.random.bernoulli(k_tgt, p=0.3, shape=shape).astype(jnp.float32)

    loss = focal_loss_2d(prob, target)
    loss = jax.block_until_ready(loss)

    ref = focal_loss_2d_ref(prob, target)
    assert jnp.allclose(loss, ref, rtol=1e-5, atol=1e-6), (loss, ref)

    print("KERNEL_OK")
</pallas_src>

<mosaic_0001>
module attributes {stable_mosaic.version = 11 : i64} {
  func.func @_focal_kernel(%arg0: i32, %arg1: i32, %arg2: memref<32x128xf32, #tpu.memory_space<vmem>>, %arg3: memref<32x128xf32, #tpu.memory_space<vmem>>, %arg4: memref<1x1x1xf32, #tpu.memory_space<vmem>>, %arg5: memref<8x128xf32, #tpu.memory_space<vmem>>) attributes {dimension_semantics = [#tpu.dimension_semantics<parallel>, #tpu.dimension_semantics<arbitrary>], iteration_bounds = array<i64: 2, 1>, scalar_prefetch = 0 : i64, scratch_operands = 1 : i64, tpu.core_type = #tpu.core_type<tc>, window_params = [{transform_indices = @transform_0, window_bounds = array<i64: 32, 128>}, {transform_indices = @transform_1, window_bounds = array<i64: 32, 128>}, {transform_indices = @transform_2, window_bounds = array<i64: 1, 1, 1>}]} {
    %c0_i32 = arith.constant 0 : i32
    %0 = arith.cmpi eq, %arg1, %c0_i32 : i32
    %1 = arith.extui %0 : i1 to i32
    %c0_i32_0 = arith.constant 0 : i32
    %2 = arith.cmpi ne, %1, %c0_i32_0 : i32
    scf.if %2 {
      %cst_19 = arith.constant 0.000000e+00 : f32
      %35 = vector.broadcast %cst_19 : f32 to vector<8x128xf32>
      %c0_20 = arith.constant 0 : index
      %c0_21 = arith.constant 0 : index
      %36 = vector.load %arg5[%c0_20, %c0_21] : memref<8x128xf32, #tpu.memory_space<vmem>>, vector<8x128xf32>
      tpu.vector_store %arg5[%c0_20, %c0_21], %35 {strides = array<i32>} : memref<8x128xf32, #tpu.memory_space<vmem>>, vector<8x128xf32>,
    } else {
    }
    %c0 = arith.constant 0 : index
    %c0_1 = arith.constant 0 : index
    %3 = vector.load %arg2[%c0, %c0_1] : memref<32x128xf32, #tpu.memory_space<vmem>>, vector<32x128xf32>
    %cst = arith.constant 9.99999997E-7 : f32
    %cst_2 = arith.constant 0.999998986 : f32
    %4 = vector.broadcast %cst : f32 to vector<32x128xf32>
    %5 = arith.maximumf %4, %3 : vector<32x128xf32>
    %6 = vector.broadcast %cst_2 : f32 to vector<32x128xf32>
    %7 = arith.minimumf %6, %5 : vector<32x128xf32>
    %c0_3 = arith.constant 0 : index
    %c0_4 = arith.constant 0 : index
    %8 = vector.load %arg3[%c0_3, %c0_4] : memref<32x128xf32, #tpu.memory_space<vmem>>, vector<32x128xf32>
    %cst_5 = arith.constant 1.000000e+00 : f32
    %9 = vector.broadcast %cst_5 : f32 to vector<32x128xf32>
    %10 = arith.cmpf oeq, %8, %9 : vector<32x128xf32>
    %cst_6 = arith.constant 0.000000e+00 : f32
    %11 = vector.broadcast %cst_6 : f32 to vector<32x128xf32>
    %12 = arith.cmpf oeq, %8, %11 : vector<32x128xf32>
    %cst_7 = arith.constant 1.000000e+00 : f32
    %13 = vector.broadcast %cst_7 : f32 to vector<32x128xf32>
    %14 = arith.subf %13, %7 : vector<32x128xf32>
    %15 = arith.select %10, %7, %14 : vector<32x128xi1>, vector<32x128xf32>
    %cst_8 = arith.constant -7.500000e-01 : f32
    %cst_9 = arith.constant 0.000000e+00 : f32
    %16 = vector.broadcast %cst_8 : f32 to vector<32x128xf32>
    %17 = vector.broadcast %cst_9 : f32 to vector<32x128xf32>
    %18 = arith.select %12, %16, %17 : vector<32x128xi1>, vector<32x128xf32>
    %cst_10 = arith.constant -2.500000e-01 : f32
    %19 = vector.broadcast %cst_10 : f32 to vector<32x128xf32>
    %20 = arith.select %10, %19, %18 : vector<32x128xi1>, vector<32x128xf32>
    %cst_11 = arith.constant 1.000000e+00 : f32
    %21 = vector.broadcast %cst_11 : f32 to vector<32x128xf32>
    %22 = arith.subf %21, %15 : vector<32x128xf32>
    %23 = arith.mulf %22, %22 : vector<32x128xf32>
    %24 = arith.mulf %20, %23 : vector<32x128xf32>
    %25 = math.log %15 : vector<32x128xf32>
    %26 = arith.mulf %24, %25 : vector<32x128xf32>
    %27 = vector.shape_cast %26 : vector<32x128xf32> to vector<4x8x128xf32>
    %cst_12 = arith.constant dense<0.000000e+00> : vector<8x128xf32>
    %28 = vector.multi_reduction <add>, %27, %cst_12 [0] : vector<4x8x128xf32> to vector<8x128xf32>
    %c0_13 = arith.constant 0 : index
    %c0_14 = arith.constant 0 : index
    %29 = vector.load %arg5[%c0_13, %c0_14] : memref<8x128xf32, #tpu.memory_space<vmem>>, vector<8x128xf32>
    %30 = arith.addf %29, %28 : vector<8x128xf32>
    %c0_15 = arith.constant 0 : index
    %c0_16 = arith.constant 0 : index
    %31 = vector.load %arg5[%c0_15, %c0_16] : memref<8x128xf32, #tpu.memory_space<vmem>>, vector<8x128xf32>
    tpu.vector_store %arg5[%c0_15, %c0_16], %30 {strides = array<i32>} : memref<8x128xf32, #tpu.memory_space<vmem>>, vector<8x128xf32>,
    %c0_i32_17 = arith.constant 0 : i32
    %32 = arith.cmpi eq, %arg1, %c0_i32_17 : i32
    %33 = arith.extui %32 : i1 to i32
    %c0_i32_18 = arith.constant 0 : i32
    %34 = arith.cmpi ne, %33, %c0_i32_18 : i32
    scf.if %34 {
      %c0_19 = arith.constant 0 : index
      %c0_20 = arith.constant 0 : index
      %35 = vector.load %arg5[%c0_19, %c0_20] : memref<8x128xf32, #tpu.memory_space<vmem>>, vector<8x128xf32>
      %36 = vector.shape_cast %35 : vector<8x128xf32> to vector<1x8x128xf32>
      %cst_21 = arith.constant dense<0.000000e+00> : vector<1xf32>
      %37 = vector.multi_reduction <add>, %36, %cst_21 [1, 2] : vector<1x8x128xf32> to vector<1xf32>
      %38 = vector.shape_cast %37 : vector<1xf32> to vector<1x1x1xf32>
      %39 = vector.extract %38[0, 0, 0] : f32 from vector<1x1x1xf32>
      %40 = vector.broadcast %39 : f32 to vector<1x1xf32>
      %c0_22 = arith.constant 0 : index
      %c0_23 = arith.constant 0 : index
      %c0_24 = arith.constant 0 : index
      %41 = vector.load %arg4[%c0_22, %c0_23, %c0_24] : memref<1x1x1xf32, #tpu.memory_space<vmem>>, vector<1x1x1xf32>
      %42 = vector.shape_cast %41 : vector<1x1x1xf32> to vector<1x1xf32>
      %43 = vector.shape_cast %40 : vector<1x1xf32> to vector<1x1x1xf32>
      tpu.vector_store %arg4[%c0_22, %c0_23, %c0_24], %43 {strides = array<i32>} : memref<1x1x1xf32, #tpu.memory_space<vmem>>, vector<1x1x1xf32>,
    } else {
    }
    return
  }
  func.func @transform_0(%arg0: i32, %arg1: i32) -> (i32, i32) {
    %c1_i32 = arith.constant 1 : i32
    %0 = arith.muli %arg0, %c1_i32 : i32
    %1 = arith.addi %0, %arg1 : i32
    %c0_i32 = arith.constant 0 : i32
    %c0_i32_0 = arith.constant 0 : i32
    return %1, %c0_i32 : i32, i32
  }
  func.func @transform_1(%arg0: i32, %arg1: i32) -> (i32, i32) {
    %c1_i32 = arith.constant 1 : i32
    %0 = arith.muli %arg0, %c1_i32 : i32
    %1 = arith.addi %0, %arg1 : i32
    %c0_i32 = arith.constant 0 : i32
    %c0_i32_0 = arith.constant 0 : i32
    return %1, %c0_i32 : i32, i32
  }
  func.func @transform_2(%arg0: i32, %arg1: i32) -> (i32, i32, i32) {
    %c0_i32 = arith.constant 0 : i32
    %c0_i32_0 = arith.constant 0 : i32
    %c0_i32_1 = arith.constant 0 : i32
    return %arg0, %c0_i32, %c0_i32_0 : i32, i32, i32
  }
}

</mosaic_0001>

<llo_original>
// kernel: tpu_custom_call.1
$region0: #{tpu_custom_call.1}
  #allocation0 [shape = 'u32[]', space=smem, size = 0x4, offset = 0x4, fixed_abs, tag = 'smem constant byte address 0x4 - core index']
  #allocation1 [shape = 'u32[144,128]{1,0:T(1,128)}', space=vmem, size = 0x12000, scoped, tag = 'internal scratch']
  #allocation2 [shape = 'f32[8,128]{1,0:T(8,128)}', space=vmem, size = 0x1000, scoped, tag = 'scratch operand']
  %s0 = inlined_call_operand.hbm [shape: f32[64,128], index: 0, kind: input, shape index: {}]
  %s1 = inlined_call_operand.hbm [shape: f32[64,128], index: 1, kind: input, shape index: {}]
  %s2 = inlined_call_operand.vmem [shape: f32[2,1,1], index: 2, kind: output, shape index: {}]
  %s3 = sld [smem:[#allocation0]]
  $region57: #{tpu_custom_call.1} parent=0
    _
  %s5 = ssub.s32 1, %s3
  %s6 = scalar_select 0, %s5, %s3
  $region1: #{tpu_custom_call.1} parent=0
    #allocation3 [shape = 'u8[32768]{0}', space=vmem, size = 0x8000, scoped, tag = 'input window, operand 0']
    #allocation4 [shape = 's32[2]{0}', space=sflag, size = 0x8, scoped, tag = 'scoped memory for tpu_custom_call.1']
    #allocation5 [shape = 'u8[32768]{0}', space=vmem, size = 0x8000, scoped, tag = 'input window, operand 1']
    #allocation6 [shape = 's32[2]{0}', space=sflag, size = 0x8, scoped, tag = 'scoped memory for tpu_custom_call.1']
    %7 = vsyncpa [#allocation4], 0
    %s8 = scalar_lea.sflag [#allocation4], 1
    %9 = vsyncpa %s8, 0
    %10 = vsyncpa [#allocation6], 0
    %s11 = scalar_lea.sflag [#allocation6], 1
    %12 = vsyncpa %s11, 0
    loop: start=0, step=1, limit=4
    $region2: #{tpu_custom_call.1} parent=1 // loop_pre_header
      _
    $region3: #{tpu_custom_call.1} parent=1 // loop_header
      %s14 = sphi 0, %s18
      %p15 = scmp.ge.s32.totalorder %s14, 4
      %s21 = sphi 0, %s33
      %s22 = sphi 0, %s29
      %s23 = sphi 0, %s21
      %s24 = sphi 0, %s22
      %s25 = sphi 0, %s23
      %s26 = sphi 0, %s24
      %s38 = sphi 0, %s40
      %s41 = sphi 0, %s38
      %s42 = sphi 0, %s41
      %s58 = sphi 0, %s42
      %s66 = sphi 0, %s68
      %s69 = sphi 0, %s66
      %s70 = sphi 0, %s69
      %s86 = sphi 0, %s70
      %s92 = sphi 0, %s94
      %s95 = sphi 0, %s92
      %s96 = sphi 0, %s95
      %s112 = sphi 0, %s96
    $region4: #{tpu_custom_call.1} parent=1 // loop_header_branch
      %17 = sbr.rel (%p15) target = $region8
    $region5: #{tpu_custom_call.1} parent=1 // loop_body
      %s19 = ssub.s32 %s14, 1
      %s20 = ssub.s32 %s14, 2
      %s27 = sadd.s32 1, %s22
      %p28 = scmp.ge.s32.totalorder %s27, 1
      %s29 = scalar_select %p28, 0, %s27
      %s30 = sadd.s32 1, %s21
      %s31 = scalar_select %p28, %s30, %s21
      %p32 = scmp.ge.s32.totalorder %s31, 2
      %s33 = scalar_select %p32, 0, %s31
      %s34 = sadd.s32 %s21, %s22
      %s35 = sadd.s32 %s33, %s29
      %s36 = ssub.s32 %s34, %s35
      %p37 = scmp.eq.s32.totalorder %s36, 0
      %s39 = sadd.s32 %s38, 1
      %s40 = scalar_select %p37, %s38, %s39
      %p43 = pneg %p37
      %p44 = scmp.eq.s32.totalorder %s14, 1
      %p45 = por %p43, %p44
      %p46 = scmp.ne.s32.totalorder %s38, %s41
      %p47 = scmp.eq.s32.totalorder %s14, 0
      %p48 = por %p46, %p47
      %p49 = scmp.ne.s32.totalorder %s38, %s41
      %p50 = scmp.eq.s32.totalorder %s19, 1
      %p51 = por %p49, %p50
      %p52 = scmp.ne.s32.totalorder %s41, %s42
      %p53 = scmp.eq.s32.totalorder %s19, 0
      %p54 = por %p52, %p53
      %p55 = scmp.ne.s32.totalorder %s41, %s42
      %p56 = scmp.eq.s32.totalorder %s20, 1
      %p57 = por %p55, %p56
      %p59 = scmp.ne.s32.totalorder %s42, %s58
      %p60 = scmp.eq.s32.totalorder %s20, 0
      %p61 = por %p59, %p60
      %s62 = sadd.s32 %s21, %s22
      %s63 = sadd.s32 %s33, %s29
      %s64 = ssub.s32 %s62, %s63
      %p65 = scmp.eq.s32.totalorder %s64, 0
      %s67 = sadd.s32 %s66, 1
      %s68 = scalar_select %p65, %s66, %s67
      %p71 = pneg %p65
      %p72 = scmp.eq.s32.totalorder %s14, 1
      %p73 = por %p71, %p72
      %p74 = scmp.ne.s32.totalorder %s66, %s69
      %p75 = scmp.eq.s32.totalorder %s14, 0
      %p76 = por %p74, %p75
      %p77 = scmp.ne.s32.totalorder %s66, %s69
      %p78 = scmp.eq.s32.totalorder %s19, 1
      %p79 = por %p77, %p78
      %p80 = scmp.ne.s32.totalorder %s69, %s70
      %p81 = scmp.eq.s32.totalorder %s19, 0
      %p82 = por %p80, %p81
      %p83 = scmp.ne.s32.totalorder %s69, %s70
      %p84 = scmp.eq.s32.totalorder %s20, 1
      %p85 = por %p83, %p84
      %p87 = scmp.ne.s32.totalorder %s70, %s86
      %p88 = scmp.eq.s32.totalorder %s20, 0
      %p89 = por %p87, %p88
      %s90 = ssub.s32 %s21, %s33
      %p91 = scmp.eq.s32.totalorder %s90, 0
      %s93 = sadd.s32 %s92, 1
      %s94 = scalar_select %p91, %s92, %s93
      %p97 = pneg %p91
      %p98 = scmp.eq.s32.totalorder %s14, 1
      %p99 = por %p97, %p98
      %p100 = scmp.ne.s32.totalorder %s92, %s95
      %p101 = scmp.eq.s32.totalorder %s14, 0
      %p102 = por %p100, %p101
      %p103 = scmp.ne.s32.totalorder %s92, %s95
      %p104 = scmp.eq.s32.totalorder %s19, 1
      %p105 = por %p103, %p104
      %p106 = scmp.ne.s32.totalorder %s95, %s96
      %p107 = scmp.eq.s32.totalorder %s19, 0
      %p108 = por %p106, %p107
      %p109 = scmp.ne.s32.totalorder %s95, %s96
      %p110 = scmp.eq.s32.totalorder %s20, 1
      %p111 = por %p109, %p110
      %p113 = scmp.ne.s32.totalorder %s96, %s112
      %p114 = scmp.eq.s32.totalorder %s20, 0
      %p115 = por %p113, %p114
      %p116 = scmp.le.s32.totalorder 1, %s14
      %p117 = scmp.lt.s32.totalorder %s14, 3
      %p118 = pnand %p116, %p117
      %p119 = pneg %p118
      // Predicated region
      $region9: #{tpu_custom_call.1} parent=5 // pred_check
        _
      $region10: #{tpu_custom_call.1} parent=5 // pred_check_branch
        %121 = sbr.rel (%p118) target = $region12
      $region11: #{tpu_custom_call.1} parent=5 // pred_region
        %s122 = ssub.s32 %s14, 1
      $region12: #{tpu_custom_call.1} parent=5 // pred_fallthru
        _
      %p123 = scmp.lt.s32.totalorder %s14, 2
      // Predicated region
      $region13: #{tpu_custom_call.1} parent=5 // pred_check
        %p124 = pneg %p123
      $region14: #{tpu_custom_call.1} parent=5 // pred_check_branch
        %126 = sbr.rel (%p124) target = $region16
      $region15: #{tpu_custom_call.1} parent=5 // pred_region
        // Predicated region
        $region17: #{tpu_custom_call.1} parent=15 // pred_check
          %p127 = pneg %p48
        $region18: #{tpu_custom_call.1} parent=15 // pred_check_branch
          %129 = sbr.rel (%p127) target = $region20
        $region19: #{tpu_custom_call.1} parent=15 // pred_region
          %s130 = sand.u32 %s38, 1
          %s131 = scalar_lea.sflag [#allocation4], %s130
          %s132 = sand.u32 %s38, 1
          %s133 = smul.addr %s132, 32
          %s134 = scalar_lea.vmem [#allocation3], %s133
          %s135 = sadd.s32 %s21, %s22
          %s136 = smul.u32 4, %s135
          %s138 = ssub.s32 512, 512
          %139 = vsyncadd %s131, %s138
          %s140 = smul.addr %s136, 128
          %s141 = scalar_lea.hbm %s0, %s140
          %s142 = sshll.u32 %s134, 4
          %s143 = int_to_ptr.vmem [resolvable:$true] %s142
          %148 = dma.hbm_to_vmem [thread:$0]  %s141, 512, %s143, %s131, 128, 128, 8
        $region20: #{tpu_custom_call.1} parent=15 // pred_fallthru
          _
        // Predicated region
        $region21: #{tpu_custom_call.1} parent=15 // pred_check
          %p149 = pneg %p76
        $region22: #{tpu_custom_call.1} parent=15 // pred_check_branch
          %151 = sbr.rel (%p149) target = $region24
        $region23: #{tpu_custom_call.1} parent=15 // pred_region
          %s152 = sand.u32 %s66, 1
          %s153 = scalar_lea.sflag [#allocation6], %s152
          %s154 = sand.u32 %s66, 1
          %s155 = smul.addr %s154, 32
          %s156 = scalar_lea.vmem [#allocation5], %s155
          %s157 = sadd.s32 %s21, %s22
          %s158 = smul.u32 4, %s157
          %s160 = ssub.s32 512, 512
          %161 = vsyncadd %s153, %s160
          %s162 = smul.addr %s158, 128
          %s163 = scalar_lea.hbm %s1, %s162
          %s164 = sshll.u32 %s156, 4
          %s165 = int_to_ptr.vmem [resolvable:$true] %s164
          %170 = dma.hbm_to_vmem [thread:$0]  %s163, 512, %s165, %s153, 128, 128, 8
        $region24: #{tpu_custom_call.1} parent=15 // pred_fallthru
          _
      $region16: #{tpu_custom_call.1} parent=5 // pred_fallthru
        _
      %p171 = scmp.le.s32.totalorder 1, %s14
      %p172 = scmp.lt.s32.totalorder %s14, 3
      %p173 = pnand %p171, %p172
      %p174 = pneg %p173
      // Predicated region
      $region25: #{tpu_custom_call.1} parent=5 // pred_check
        _
      $region26: #{tpu_custom_call.1} parent=5 // pred_check_branch
        %176 = sbr.rel (%p173) target = $region28
      $region27: #{tpu_custom_call.1} parent=5 // pred_region
        %s177 = ssub.s32 %s14, 1
        %s178 = sand.u32 %s41, 1
        %s179 = scalar_lea.sflag [#allocation4], %s178
        %s180 = sand.u32 %s41, 1
        %s181 = smul.addr %s180, 32
        %s182 = scalar_lea.vmem [#allocation3], %s181
        // Predicated region
        $region29: #{tpu_custom_call.1} parent=27 // pred_check
          %p183 = pneg %p54
        $region30: #{tpu_custom_call.1} parent=27 // pred_check_branch
          %185 = sbr.rel (%p183) target = $region32
        $region31: #{tpu_custom_call.1} parent=27 // pred_region
          %186 = dma.done %s179, 512
        $region32: #{tpu_custom_call.1} parent=27 // pred_fallthru
          _
        %s187 = sand.u32 %s69, 1
        %s188 = scalar_lea.sflag [#allocation6], %s187
        %s189 = sand.u32 %s69, 1
        %s190 = smul.addr %s189, 32
        %s191 = scalar_lea.vmem [#allocation5], %s190
        // Predicated region
        $region33: #{tpu_custom_call.1} parent=27 // pred_check
          %p192 = pneg %p82
        $region34: #{tpu_custom_call.1} parent=27 // pred_check_branch
          %194 = sbr.rel (%p192) target = $region36
        $region35: #{tpu_custom_call.1} parent=27 // pred_region
          %195 = dma.done %s188, 512
        $region36: #{tpu_custom_call.1} parent=27 // pred_fallthru
          _
        %s196 = sand.u32 %s41, 1
        %s197 = scalar_lea.sflag [#allocation4], %s196
        %s198 = sand.u32 %s41, 1
        %s199 = smul.addr %s198, 32
        %s200 = scalar_lea.vmem [#allocation3], %s199
        %p201 = pneg %p54
        %p202 = pneg %p51
        %s203 = sand.u32 %s69, 1
        %s204 = scalar_lea.sflag [#allocation6], %s203
        %s205 = sand.u32 %s69, 1
        %s206 = smul.addr %s205, 32
        %s207 = scalar_lea.vmem [#allocation5], %s206
        %p208 = pneg %p82
        %p209 = pneg %p79
        %p210 = pneg %p108
        %p211 = pneg %p105
        %p212 = scmp.lt.s32.totalorder %s23, 1
        %s213 = scalar_select %p212, %s23, 1
        %s214 = scalar_lea.vmem %s2, %s213
        %s215 = sadd.s32 %s23, %s24
        %s216 = smul.u32 4, %s215
        %s217 = sadd.s32 %s23, %s24
        %s218 = smul.u32 4, %s217
        %p219 = scmp.lt.s32.totalorder %s23, 1
        %s220 = scalar_select %p219, %s23, 1
        %s221 = scalar_lea.vmem %s2, %s220
        %p222 = scmp.eq.s32.totalorder %s24, 0
        // Predicated region
        $region37: #{tpu_custom_call.1} parent=27 // pred_check
          %p223 = pneg %p222
        $region38: #{tpu_custom_call.1} parent=27 // pred_check_branch
          %225 = sbr.rel (%p223) target = $region40
        $region39: #{tpu_custom_call.1} parent=27 // pred_region
          %226 = vst [vmem:[#allocation2] sm:$0xff] 0.0
        $region40: #{tpu_custom_call.1} parent=27 // pred_fallthru
          _
        %v227 = vld [vmem:[%s182] sm:$0xff]
        %v228 = vld [vmem:[%s182 + $0x8] sm:$0xff]
        %v229 = vld [vmem:[%s182 + $0x10] sm:$0xff]
        %v230 = vld [vmem:[%s182 + $0x18] sm:$0xff]
        %v231 = vmax.f32 %v227, 1e-06
        %v232 = vmax.f32 %v228, 1e-06
        %v233 = vmax.f32 %v229, 1e-06
        %v234 = vmax.f32 %v230, 1e-06
        %v235 = vmin.f32 %v231, 0.999999
        %v236 = vmin.f32 %v232, 0.999999
        %v237 = vmin.f32 %v233, 0.999999
        %v238 = vmin.f32 %v234, 0.999999
        %v239 = vld [vmem:[%s191] sm:$0xff]
        %v240 = vld [vmem:[%s191 + $0x8] sm:$0xff]
        %v241 = vld [vmem:[%s191 + $0x10] sm:$0xff]
        %v242 = vld [vmem:[%s191 + $0x18] sm:$0xff]
        %vm243 = vcmp.eq.f32.partialorder %v239, 1.0
        %vm244 = vcmp.eq.f32.partialorder %v240, 1.0
        %vm245 = vcmp.eq.f32.partialorder %v241, 1.0
        %vm246 = vcmp.eq.f32.partialorder %v242, 1.0
        %vm247 = vcmp.eq.f32.partialorder %v239, 0.0
        %vm248 = vcmp.eq.f32.partialorder %v240, 0.0
        %vm249 = vcmp.eq.f32.partialorder %v241, 0.0
        %vm250 = vcmp.eq.f32.partialorder %v242, 0.0
        %v251 = vsub.f32 1.0, %v235
        %v252 = vsub.f32 1.0, %v236
        %v253 = vsub.f32 1.0, %v237
        %v254 = vsub.f32 1.0, %v238
        %v255 = vsel %vm243, %v235, %v251
        %v256 = vsel %vm244, %v236, %v252
        %v257 = vsel %vm245, %v237, %v253
        %v258 = vsel %vm246, %v238, %v254
        %v259 = vsel %vm247, -0.75, 0.0
        %v260 = vsel %vm248, -0.75, 0.0
        %v261 = vsel %vm249, -0.75, 0.0
        %v262 = vsel %vm250, -0.75, 0.0
        %v263 = vsel %vm243, -0.25, %v259
        %v264 = vsel %vm244, -0.25, %v260
        %v265 = vsel %vm245, -0.25, %v261
        %v266 = vsel %vm246, -0.25, %v262
        %v267 = vsub.f32 1.0, %v255
        %v268 = vsub.f32 1.0, %v256
        %v269 = vsub.f32 1.0, %v257
        %v270 = vsub.f32 1.0, %v258
        %v271 = vmul.f32 %v267, %v267
        %v272 = vmul.f32 %v268, %v268
        %v273 = vmul.f32 %v269, %v269
        %v274 = vmul.f32 %v270, %v270
        %v275 = vmul.f32 %v263, %v271
        %v276 = vmul.f32 %v264, %v272
        %v277 = vmul.f32 %v265, %v273
        %v278 = vmul.f32 %v266, %v274
        %v279 = vlog2.pop %v255
        %v280 = vmul.f32 %v279, 0.6931472
        %v281 = vlog2.pop %v256
        %v282 = vmul.f32 %v281, 0.6931472
        %v283 = vlog2.pop %v257
        %v284 = vmul.f32 %v283, 0.6931472
        %v285 = vlog2.pop %v258
        %v286 = vmul.f32 %v285, 0.6931472
        %v287 = vmul.f32 %v275, %v280
        %v288 = vmul.f32 %v276, %v282
        %v289 = vmul.f32 %v277, %v284
        %v290 = vmul.f32 %v278, %v286
        %v291 = vadd.f32 %v287, %v288
        %v292 = vadd.f32 %v291, %v289
        %v293 = vadd.f32 %v292, %v290
        %v294 = vld [vmem:[#allocation2] sm:$0xff]
        %v295 = vadd.f32 %v294, %v293
        %296 = vst [vmem:[#allocation2] sm:$0xff] %v295
        // Predicated region
        $region41: #{tpu_custom_call.1} parent=27 // pred_check
          %p297 = pneg %p222
        $region42: #{tpu_custom_call.1} parent=27 // pred_check_branch
          %299 = sbr.rel (%p297) target = $region44
        $region43: #{tpu_custom_call.1} parent=27 // pred_region
          %v300 = vld [vmem:[#allocation2] sm:$0xff]
          %301 = vadd.xlane.f32.xlu0 %v300
          %v302 = vpop.xlane.xlu0 %301
          %v303 = vrot.slane %v302, 4
          %v304 = vadd.f32 %v302, %v303
          %v305 = vrot.slane %v304, 2
          %v306 = vadd.f32 %v304, %v305
          %v307 = vrot.slane %v306, 1
          %v308 = vadd.f32 %v306, %v307
          %s309 = vtos %v308
          %v310 = vstv %s309
          %vm311 = vcmask 0
          %312 = vst.msk [vmem:[%s221] sm:$0x1] %vm311, %v310
        $region44: #{tpu_custom_call.1} parent=27 // pred_fallthru
          _
        %p313 = scmp.lt.s32.totalorder %s23, 1
        %s314 = scalar_select %p313, %s23, 1
        %s315 = scalar_lea.vmem %s2, %s314
        // Predicated region
        $region45: #{tpu_custom_call.1} parent=27 // pred_check
          %p316 = pneg %p105
        $region46: #{tpu_custom_call.1} parent=27 // pred_check_branch
          %318 = sbr.rel (%p316) target = $region48
        $region47: #{tpu_custom_call.1} parent=27 // pred_region
          _
        $region48: #{tpu_custom_call.1} parent=27 // pred_fallthru
          _
      $region28: #{tpu_custom_call.1} parent=5 // pred_fallthru
        _
      %p319 = scmp.le.s32.totalorder 2, %s14
      // Predicated region
      $region49: #{tpu_custom_call.1} parent=5 // pred_check
        %p320 = pneg %p319
      $region50: #{tpu_custom_call.1} parent=5 // pred_check_branch
        %322 = sbr.rel (%p320) target = $region52
      $region51: #{tpu_custom_call.1} parent=5 // pred_region
        %s323 = ssub.s32 %s14, 2
        // Predicated region
        $region53: #{tpu_custom_call.1} parent=51 // pred_check
          %p324 = pneg %p111
        $region54: #{tpu_custom_call.1} parent=51 // pred_check_branch
          %326 = sbr.rel (%p324) target = $region56
        $region55: #{tpu_custom_call.1} parent=51 // pred_region
          %p327 = scmp.lt.s32.totalorder %s25, 1
          %s328 = scalar_select %p327, %s25, 1
          %s329 = scalar_lea.vmem %s2, %s328
        $region56: #{tpu_custom_call.1} parent=51 // pred_fallthru
          _
      $region52: #{tpu_custom_call.1} parent=5 // pred_fallthru
        _
    $region6: #{tpu_custom_call.1} parent=1 // loop_footer
      %s18 = sadd.s32 1, %s14
    $region7: #{tpu_custom_call.1} parent=1 // loop_footer_branch
      %13 = sbr.rel target = $region3
    $region8: #{tpu_custom_call.1} parent=1 // loop_exit
      _
    %330 = vsyncpa [#allocation4], 1
    %s331 = scalar_lea.sflag [#allocation4], 1
    %332 = vsyncpa %s331, 1
    %333 = vsyncpa [#allocation6], 1
    %s334 = scalar_lea.sflag [#allocation6], 1
    %335 = vsyncpa %s334, 1

</llo_original>
